<compile_context>
chip_gen: v7x
topology: tpu7x:2x2x1
jax: 0.10.0
libtpu: 0.0.40
codegen_flags: <defaults>
</compile_context>

<pallas_src>
import jax
import jax.numpy as jnp
from jax.experimental import pallas as pl
from jax.experimental.pallas import tpu as pltpu


def _attn_fusion_kernel(m_ref, r_ref,
                        w1m_ref, w1r_ref, b1_ref,
                        w2m_ref, w2r_ref, b2m_ref, b2r_ref,
                        wf1m_ref, wf1r_ref, bf1_ref,
                        wf2_ref, bf2_ref,
                        o_ref):
    """Fused attention-gating + fusion MLP for one batch tile.

    m_ref  : [TB, Dm]   precomputed MPNN output tile
    r_ref  : [TB, Dr]   selected RDKit features tile
    w1*/b1 : attn_fc layer 0 (split over input rows, H padded to 128)
    w2*/b2*: attn_fc layer 2 (split over output cols Dm/Dr, pre-softmax)
    wf1*/bf1: fusion layer 0 (split over input rows, H padded to 128)
    wf2/bf2 : fusion layer 2 (O padded to 128)
    o_ref  : [TB, O_pad]
    """
    m_f32 = m_ref[...].astype(jnp.float32)
    r_f32 = r_ref[...].astype(jnp.float32)
    m_bf = m_f32.astype(jnp.bfloat16)
    r_bf = r_f32.astype(jnp.bfloat16)

    # attn_fc layer 0: Linear(D -> H) + ReLU on the virtually-concatenated x.
    h1 = (jnp.dot(m_bf, w1m_ref[...], preferred_element_type=jnp.float32)
          + jnp.dot(r_bf, w1r_ref[...], preferred_element_type=jnp.float32)
          + b1_ref[...])
    h1 = jnp.maximum(h1, 0.0)
    h1_bf = h1.astype(jnp.bfloat16)

    # attn_fc layer 2: Linear(H -> D), split over the D output axis.
    lm = jnp.dot(h1_bf, w2m_ref[...], preferred_element_type=jnp.float32) + b2m_ref[...]
    lr = jnp.dot(h1_bf, w2r_ref[...], preferred_element_type=jnp.float32) + b2r_ref[...]

    # Softmax over the (split) combined feature axis.
    row_max = jnp.maximum(jnp.max(lm, axis=-1, keepdims=True),
                          jnp.max(lr, axis=-1, keepdims=True))
    em = jnp.exp(lm - row_max)
    er = jnp.exp(lr - row_max)
    denom = (jnp.sum(em, axis=-1, keepdims=True)
             + jnp.sum(er, axis=-1, keepdims=True))
    inv = pl.reciprocal(denom, approx=True)   # EUP vrcp slot: essentially free.

    # Attention gating (f32), then the fusion MLP.
    fused_m = (em * inv * m_f32).astype(jnp.bfloat16)
    fused_r = (er * inv * r_f32).astype(jnp.bfloat16)

    h2 = (jnp.dot(fused_m, wf1m_ref[...], preferred_element_type=jnp.float32)
          + jnp.dot(fused_r, wf1r_ref[...], preferred_element_type=jnp.float32)
          + bf1_ref[...])
    h2 = jnp.maximum(h2, 0.0)

    out = (jnp.dot(h2.astype(jnp.bfloat16), wf2_ref[...],
                   preferred_element_type=jnp.float32)
           + bf2_ref[...])
    o_ref[...] = out.astype(o_ref.dtype)


def _round_up(x, m):
    return (x + m - 1) // m * m


def attention_fusion_forward(mpnn_out, selected_rdkit, params, *, tile_b=None):
    """Attention-fusion forward pass in a single Pallas kernel.

    mpnn_out       : [B, mpnn_dim]  float32 (stand-in for chemprop MPNN output)
    selected_rdkit : [B, rdkit_dim] float32 (already column-selected RDKit feats)
    params         : dict of unpadded f32 weights (see init_params)
    """
    B, Dm = mpnn_out.shape
    Br, Dr = selected_rdkit.shape
    assert B == Br
    H = params["w1"].shape[1]
    O = params["wf2"].shape[1]

    LANE, SUB = 128, 8
    H_pad = _round_up(H, LANE)
    O_pad = _round_up(O, LANE)
    f32, bf16 = jnp.float32, jnp.bfloat16

    def pad_to(a, rows, cols):
        return jnp.pad(a, ((0, rows - a.shape[0]), (0, cols - a.shape[1])))

    # Split weights over the combined feature axis (mpnn rows / cols first,
    # rdkit second) and zero-pad hidden / output widths to 128 lanes.
    w1, w2, wf1 = params["w1"], params["w2"], params["wf1"]
    w1m = pad_to(w1[:Dm], Dm, H_pad).astype(bf16)
    w1r = pad_to(w1[Dm:], Dr, H_pad).astype(bf16)
    b1 = pad_to(params["b1"], 1, H_pad).astype(f32)
    w2m = pad_to(w2[:, :Dm], H_pad, Dm).astype(bf16)
    w2r = pad_to(w2[:, Dm:], H_pad, Dr).astype(bf16)
    b2m = params["b2"][:, :Dm].astype(f32)
    b2r = params["b2"][:, Dm:].astype(f32)
    wf1m = pad_to(wf1[:Dm], Dm, H_pad).astype(bf16)
    wf1r = pad_to(wf1[Dm:], Dr, H_pad).astype(bf16)
    bf1 = pad_to(params["bf1"], 1, H_pad).astype(f32)
    wf2 = pad_to(params["wf2"], H_pad, O_pad).astype(bf16)
    bf2 = pad_to(params["bf2"], 1, O_pad).astype(f32)

    # Batch tiling: 8-row sublane multiples, big tiles (<=512 rows) to amortize
    # per-grid-step overhead, and >=2 steps when possible so "parallel" can
    # shard the batch across two TensorCores on v7x.
    B_pad = _round_up(B, SUB)
    if tile_b is None:
        tile_b = min(B_pad, 512)
        if B_pad > SUB and B_pad // tile_b < 2:
            tile_b = _round_up(B_pad // 2, SUB)
    tile_b = max(SUB, _round_up(tile_b, SUB))
    B_pad = _round_up(B_pad, tile_b)
    grid = (B_pad // tile_b,)

    if B_pad != B:
        pad = B_pad - B
        mpnn_out = jnp.pad(mpnn_out, ((0, pad), (0, 0)))
        selected_rdkit = jnp.pad(selected_rdkit, ((0, pad), (0, 0)))

    full = lambda shape: pl.BlockSpec(shape, lambda i: (0, 0))

    out = pl.pallas_call(
        _attn_fusion_kernel,
        out_shape=jax.ShapeDtypeStruct((B_pad, O_pad), jnp.float32),
        grid_spec=pltpu.PrefetchScalarGridSpec(
            num_scalar_prefetch=0,
            grid=grid,
            in_specs=[
                pl.BlockSpec((tile_b, Dm), lambda i: (i, 0)),   # mpnn tile
                pl.BlockSpec((tile_b, Dr), lambda i: (i, 0)),   # rdkit tile
                full((Dm, H_pad)), full((Dr, H_pad)), full((1, H_pad)),  # attn L0
                full((H_pad, Dm)), full((H_pad, Dr)),                    # attn L2 W
                full((1, Dm)), full((1, Dr)),                            # attn L2 b
                full((Dm, H_pad)), full((Dr, H_pad)), full((1, H_pad)),  # fusion L0
                full((H_pad, O_pad)), full((1, O_pad)),                  # fusion L2
            ],
            out_specs=pl.BlockSpec((tile_b, O_pad), lambda i: (i, 0)),
        ),
        compiler_params=pltpu.CompilerParams(
            dimension_semantics=("parallel",),
            vmem_limit_bytes=32 * 1024 * 1024),
    )(mpnn_out, selected_rdkit,
      w1m, w1r, b1, w2m, w2r, b2m, b2r, wf1m, wf1r, bf1, wf2, bf2)

    # Drop batch padding and lane padding of the output.
    return out[:B, :O]


def init_params(key, mpnn_dim, rdkit_dim, hidden_dim, output_dim):
    """Deterministic synthetic parameter init (shapes follow the nn.Module)."""
    D = mpnn_dim + rdkit_dim
    ks = jax.random.split(key, 8)
    scale = 0.1
    return {
        "w1":  scale * jax.random.normal(ks[0], (D, hidden_dim), jnp.float32),
        "b1":  scale * jax.random.normal(ks[1], (1, hidden_dim), jnp.float32),
        "w2":  scale * jax.random.normal(ks[2], (hidden_dim, D), jnp.float32),
        "b2":  scale * jax.random.normal(ks[3], (1, D), jnp.float32),
        "wf1": scale * jax.random.normal(ks[4], (D, hidden_dim), jnp.float32),
        "bf1": scale * jax.random.normal(ks[5], (1, hidden_dim), jnp.float32),
        "wf2": scale * jax.random.normal(ks[6], (hidden_dim, output_dim), jnp.float32),
        "bf2": scale * jax.random.normal(ks[7], (1, output_dim), jnp.float32),
    }


def reference_forward(mpnn_out, selected_rdkit, params):
    """Pure-JAX f32 reference matching the PyTorch module semantics."""
    x = jnp.concatenate([mpnn_out, selected_rdkit], axis=-1)
    h1 = jax.nn.relu(x @ params["w1"] + params["b1"])
    attn = jax.nn.softmax(h1 @ params["w2"] + params["b2"], axis=-1)
    fused = attn * x
    h2 = jax.nn.relu(fused @ params["wf1"] + params["bf1"])
    return h2 @ params["wf2"] + params["bf2"]


if __name__ == "__main__":
    key = jax.random.PRNGKey(0)
    k_params, k_mpnn, k_rdkit = jax.random.split(key, 3)

    # Small, module-consistent shapes.
    B = 8               # molecules in the batch
    MPNN_DIM = 32       # self.mpnn.output_dim
    RDKIT_TOTAL = 24    # full rdkit descriptor tensor width
    RDKIT_DIM = 16      # len(selected_rdkit_features)
    HIDDEN = 32         # hidden_dim
    OUTPUT = 16         # output_dim

    params = init_params(k_params, MPNN_DIM, RDKIT_DIM, HIDDEN, OUTPUT)

    # Precomputed MPNN output (stand-in for chemprop MPNN on molgraphs).
    mpnn_out = jax.random.normal(k_mpnn, (B, MPNN_DIM), jnp.float32)
    # Raw rdkit descriptor tensor; deterministic column-select glue
    # (equivalent of rdkit_featurizer.select_features).
    rdkit_tensor = jax.random.normal(k_rdkit, (B, RDKIT_TOTAL), jnp.float32)
    selected_idx = jnp.arange(RDKIT_DIM, dtype=jnp.int32)
    selected_rdkit = jnp.take(rdkit_tensor, selected_idx, axis=-1)

    out = attention_fusion_forward(mpnn_out, selected_rdkit, params)
    out = jax.block_until_ready(out)

    ref = reference_forward(mpnn_out, selected_rdkit, params)
    assert out.shape == (B, OUTPUT)
    # bf16 MXU inputs + approx reciprocal: compare at a loosened tolerance.
    assert jnp.allclose(out, ref, atol=1e-2, rtol=1e-2), "mismatch vs reference"

    print("KERNEL_OK")
</pallas_src>

<mosaic_0001>
module attributes {stable_mosaic.version = 11 : i64} {
  func.func @_attn_fusion_kernel(%arg0: i32, %arg1: memref<8x32xf32, #tpu.memory_space<vmem>>, %arg2: memref<8x16xf32, #tpu.memory_space<vmem>>, %arg3: memref<32x128xbf16, #tpu.memory_space<vmem>>, %arg4: memref<16x128xbf16, #tpu.memory_space<vmem>>, %arg5: memref<1x128xf32, #tpu.memory_space<vmem>>, %arg6: memref<128x32xbf16, #tpu.memory_space<vmem>>, %arg7: memref<128x16xbf16, #tpu.memory_space<vmem>>, %arg8: memref<1x32xf32, #tpu.memory_space<vmem>>, %arg9: memref<1x16xf32, #tpu.memory_space<vmem>>, %arg10: memref<32x128xbf16, #tpu.memory_space<vmem>>, %arg11: memref<16x128xbf16, #tpu.memory_space<vmem>>, %arg12: memref<1x128xf32, #tpu.memory_space<vmem>>, %arg13: memref<128x128xbf16, #tpu.memory_space<vmem>>, %arg14: memref<1x128xf32, #tpu.memory_space<vmem>>, %arg15: memref<8x128xf32, #tpu.memory_space<vmem>>) attributes {dimension_semantics = [#tpu.dimension_semantics<parallel>], iteration_bounds = array<i64: 1>, scalar_prefetch = 0 : i64, scratch_operands = 0 : i64, tpu.core_type = #tpu.core_type<tc>, window_params = [{transform_indices = @transform_0, window_bounds = array<i64: 8, 32>}, {transform_indices = @transform_1, window_bounds = array<i64: 8, 16>}, {pipeline_mode = #tpu.pipeline_mode<synchronous>, transform_indices = @transform_2, window_bounds = array<i64: 32, 128>}, {pipeline_mode = #tpu.pipeline_mode<synchronous>, transform_indices = @transform_3, window_bounds = array<i64: 16, 128>}, {pipeline_mode = #tpu.pipeline_mode<synchronous>, transform_indices = @transform_4, window_bounds = array<i64: 1, 128>}, {pipeline_mode = #tpu.pipeline_mode<synchronous>, transform_indices = @transform_5, window_bounds = array<i64: 128, 32>}, {pipeline_mode = #tpu.pipeline_mode<synchronous>, transform_indices = @transform_6, window_bounds = array<i64: 128, 16>}, {pipeline_mode = #tpu.pipeline_mode<synchronous>, transform_indices = @transform_7, window_bounds = array<i64: 1, 32>}, {pipeline_mode = #tpu.pipeline_mode<synchronous>, transform_indices = @transform_8, window_bounds = array<i64: 1, 16>}, {pipeline_mode = #tpu.pipeline_mode<synchronous>, transform_indices = @transform_9, window_bounds = array<i64: 32, 128>}, {pipeline_mode = #tpu.pipeline_mode<synchronous>, transform_indices = @transform_10, window_bounds = array<i64: 16, 128>}, {pipeline_mode = #tpu.pipeline_mode<synchronous>, transform_indices = @transform_11, window_bounds = array<i64: 1, 128>}, {pipeline_mode = #tpu.pipeline_mode<synchronous>, transform_indices = @transform_12, window_bounds = array<i64: 128, 128>}, {pipeline_mode = #tpu.pipeline_mode<synchronous>, transform_indices = @transform_13, window_bounds = array<i64: 1, 128>}, {transform_indices = @transform_14, window_bounds = array<i64: 8, 128>}]} {
    %c0 = arith.constant 0 : index
    %c0_0 = arith.constant 0 : index
    %0 = vector.load %arg1[%c0, %c0_0] : memref<8x32xf32, #tpu.memory_space<vmem>>, vector<8x32xf32>
    %c0_1 = arith.constant 0 : index
    %c0_2 = arith.constant 0 : index
    %1 = vector.load %arg2[%c0_1, %c0_2] : memref<8x16xf32, #tpu.memory_space<vmem>>, vector<8x16xf32>
    %2 = arith.truncf %0 : vector<8x32xf32> to vector<8x32xbf16>
    %3 = arith.truncf %1 : vector<8x16xf32> to vector<8x16xbf16>
    %c0_3 = arith.constant 0 : index
    %c0_4 = arith.constant 0 : index
    %4 = vector.load %arg3[%c0_3, %c0_4] : memref<32x128xbf16, #tpu.memory_space<vmem>>, vector<32x128xbf16>
    %cst = arith.constant dense<0.000000e+00> : vector<8x128xf32>
    %5 = tpu.matmul %2, %4, %cst {dimension_numbers = #tpu.dot_dimension_numbers<[1], [0], [0], [1], [0, 0, 1, 1], [], []>} : vector<8x32xbf16>, vector<32x128xbf16>, vector<8x128xf32> -> vector<8x128xf32>
    %c0_5 = arith.constant 0 : index
    %c0_6 = arith.constant 0 : index
    %6 = vector.load %arg4[%c0_5, %c0_6] : memref<16x128xbf16, #tpu.memory_space<vmem>>, vector<16x128xbf16>
    %cst_7 = arith.constant dense<0.000000e+00> : vector<8x128xf32>
    %7 = tpu.matmul %3, %6, %cst_7 {dimension_numbers = #tpu.dot_dimension_numbers<[1], [0], [0], [1], [0, 0, 1, 1], [], []>} : vector<8x16xbf16>, vector<16x128xbf16>, vector<8x128xf32> -> vector<8x128xf32>
    %8 = arith.addf %5, %7 : vector<8x128xf32>
    %c0_8 = arith.constant 0 : index
    %c0_9 = arith.constant 0 : index
    %9 = vector.load %arg5[%c0_8, %c0_9] : memref<1x128xf32, #tpu.memory_space<vmem>>, vector<1x128xf32>
    %10 = vector.broadcast %9 : vector<1x128xf32> to vector<8x128xf32>
    %11 = arith.addf %8, %10 : vector<8x128xf32>
    %cst_10 = arith.constant 0.000000e+00 : f32
    %12 = vector.broadcast %cst_10 : f32 to vector<8x128xf32>
    %13 = arith.maximumf %11, %12 : vector<8x128xf32>
    %14 = arith.truncf %13 : vector<8x128xf32> to vector<8x128xbf16>
    %c0_11 = arith.constant 0 : index
    %c0_12 = arith.constant 0 : index
    %15 = vector.load %arg6[%c0_11, %c0_12] : memref<128x32xbf16, #tpu.memory_space<vmem>>, vector<128x32xbf16>
    %cst_13 = arith.constant dense<0.000000e+00> : vector<8x32xf32>
    %16 = tpu.matmul %14, %15, %cst_13 {dimension_numbers = #tpu.dot_dimension_numbers<[1], [0], [0], [1], [0, 0, 1, 1], [], []>} : vector<8x128xbf16>, vector<128x32xbf16>, vector<8x32xf32> -> vector<8x32xf32>
    %c0_14 = arith.constant 0 : index
    %c0_15 = arith.constant 0 : index
    %17 = vector.load %arg8[%c0_14, %c0_15] : memref<1x32xf32, #tpu.memory_space<vmem>>, vector<1x32xf32>
    %18 = vector.broadcast %17 : vector<1x32xf32> to vector<8x32xf32>
    %19 = arith.addf %16, %18 : vector<8x32xf32>
    %c0_16 = arith.constant 0 : index
    %c0_17 = arith.constant 0 : index
    %20 = vector.load %arg7[%c0_16, %c0_17] : memref<128x16xbf16, #tpu.memory_space<vmem>>, vector<128x16xbf16>
    %cst_18 = arith.constant dense<0.000000e+00> : vector<8x16xf32>
    %21 = tpu.matmul %14, %20, %cst_18 {dimension_numbers = #tpu.dot_dimension_numbers<[1], [0], [0], [1], [0, 0, 1, 1], [], []>} : vector<8x128xbf16>, vector<128x16xbf16>, vector<8x16xf32> -> vector<8x16xf32>
    %c0_19 = arith.constant 0 : index
    %c0_20 = arith.constant 0 : index
    %22 = vector.load %arg9[%c0_19, %c0_20] : memref<1x16xf32, #tpu.memory_space<vmem>>, vector<1x16xf32>
    %23 = vector.broadcast %22 : vector<1x16xf32> to vector<8x16xf32>
    %24 = arith.addf %21, %23 : vector<8x16xf32>
    %cst_21 = arith.constant dense<0xFF800000> : vector<8xf32>
    %25 = vector.multi_reduction <maximumf>, %19, %cst_21 [1] : vector<8x32xf32> to vector<8xf32>
    %26 = vector.shape_cast %25 : vector<8xf32> to vector<8x1xf32>
    %cst_22 = arith.constant dense<0xFF800000> : vector<8xf32>
    %27 = vector.multi_reduction <maximumf>, %24, %cst_22 [1] : vector<8x16xf32> to vector<8xf32>
    %28 = vector.shape_cast %27 : vector<8xf32> to vector<8x1xf32>
    %29 = arith.maximumf %26, %28 : vector<8x1xf32>
    %30 = vector.broadcast %29 : vector<8x1xf32> to vector<8x32xf32>
    %31 = arith.subf %19, %30 : vector<8x32xf32>
    %32 = math.exp %31 : vector<8x32xf32>
    %33 = vector.broadcast %29 : vector<8x1xf32> to vector<8x16xf32>
    %34 = arith.subf %24, %33 : vector<8x16xf32>
    %35 = math.exp %34 : vector<8x16xf32>
    %cst_23 = arith.constant dense<0.000000e+00> : vector<8xf32>
    %36 = vector.multi_reduction <add>, %32, %cst_23 [1] : vector<8x32xf32> to vector<8xf32>
    %37 = vector.shape_cast %36 : vector<8xf32> to vector<8x1xf32>
    %cst_24 = arith.constant dense<0.000000e+00> : vector<8xf32>
    %38 = vector.multi_reduction <add>, %35, %cst_24 [1] : vector<8x16xf32> to vector<8xf32>
    %39 = vector.shape_cast %38 : vector<8xf32> to vector<8x1xf32>
    %40 = arith.addf %37, %39 : vector<8x1xf32>
    %41 = tpu.reciprocal %40 {approx = true} : vector<8x1xf32> -> vector<8x1xf32>
    %42 = vector.broadcast %41 : vector<8x1xf32> to vector<8x32xf32>
    %43 = arith.mulf %32, %42 : vector<8x32xf32>
    %44 = arith.mulf %43, %0 : vector<8x32xf32>
    %45 = arith.truncf %44 : vector<8x32xf32> to vector<8x32xbf16>
    %46 = vector.broadcast %41 : vector<8x1xf32> to vector<8x16xf32>
    %47 = arith.mulf %35, %46 : vector<8x16xf32>
    %48 = arith.mulf %47, %1 : vector<8x16xf32>
    %49 = arith.truncf %48 : vector<8x16xf32> to vector<8x16xbf16>
    %c0_25 = arith.constant 0 : index
    %c0_26 = arith.constant 0 : index
    %50 = vector.load %arg10[%c0_25, %c0_26] : memref<32x128xbf16, #tpu.memory_space<vmem>>, vector<32x128xbf16>
    %cst_27 = arith.constant dense<0.000000e+00> : vector<8x128xf32>
    %51 = tpu.matmul %45, %50, %cst_27 {dimension_numbers = #tpu.dot_dimension_numbers<[1], [0], [0], [1], [0, 0, 1, 1], [], []>} : vector<8x32xbf16>, vector<32x128xbf16>, vector<8x128xf32> -> vector<8x128xf32>
    %c0_28 = arith.constant 0 : index
    %c0_29 = arith.constant 0 : index
    %52 = vector.load %arg11[%c0_28, %c0_29] : memref<16x128xbf16, #tpu.memory_space<vmem>>, vector<16x128xbf16>
    %cst_30 = arith.constant dense<0.000000e+00> : vector<8x128xf32>
    %53 = tpu.matmul %49, %52, %cst_30 {dimension_numbers = #tpu.dot_dimension_numbers<[1], [0], [0], [1], [0, 0, 1, 1], [], []>} : vector<8x16xbf16>, vector<16x128xbf16>, vector<8x128xf32> -> vector<8x128xf32>
    %54 = arith.addf %51, %53 : vector<8x128xf32>
    %c0_31 = arith.constant 0 : index
    %c0_32 = arith.constant 0 : index
    %55 = vector.load %arg12[%c0_31, %c0_32] : memref<1x128xf32, #tpu.memory_space<vmem>>, vector<1x128xf32>
    %56 = vector.broadcast %55 : vector<1x128xf32> to vector<8x128xf32>
    %57 = arith.addf %54, %56 : vector<8x128xf32>
    %cst_33 = arith.constant 0.000000e+00 : f32
    %58 = vector.broadcast %cst_33 : f32 to vector<8x128xf32>
    %59 = arith.maximumf %57, %58 : vector<8x128xf32>
    %60 = arith.truncf %59 : vector<8x128xf32> to vector<8x128xbf16>
    %c0_34 = arith.constant 0 : index
    %c0_35 = arith.constant 0 : index
    %61 = vector.load %arg13[%c0_34, %c0_35] : memref<128x128xbf16, #tpu.memory_space<vmem>>, vector<128x128xbf16>
    %cst_36 = arith.constant dense<0.000000e+00> : vector<8x128xf32>
    %62 = tpu.matmul %60, %61, %cst_36 {dimension_numbers = #tpu.dot_dimension_numbers<[1], [0], [0], [1], [0, 0, 1, 1], [], []>} : vector<8x128xbf16>, vector<128x128xbf16>, vector<8x128xf32> -> vector<8x128xf32>
    %c0_37 = arith.constant 0 : index
    %c0_38 = arith.constant 0 : index
    %63 = vector.load %arg14[%c0_37, %c0_38] : memref<1x128xf32, #tpu.memory_space<vmem>>, vector<1x128xf32>
    %64 = vector.broadcast %63 : vector<1x128xf32> to vector<8x128xf32>
    %65 = arith.addf %62, %64 : vector<8x128xf32>
    %c0_39 = arith.constant 0 : index
    %c0_40 = arith.constant 0 : index
    %66 = vector.load %arg15[%c0_39, %c0_40] : memref<8x128xf32, #tpu.memory_space<vmem>>, vector<8x128xf32>
    tpu.vector_store %arg15[%c0_39, %c0_40], %65 {strides = array<i32>} : memref<8x128xf32, #tpu.memory_space<vmem>>, vector<8x128xf32>,
    return
  }
  func.func @transform_0(%arg0: i32) -> (i32, i32) {
    %c0_i32 = arith.constant 0 : i32
    %c0_i32_0 = arith.constant 0 : i32
    return %arg0, %c0_i32 : i32, i32
  }
  func.func @transform_1(%arg0: i32) -> (i32, i32) {
    %c0_i32 = arith.constant 0 : i32
    %c0_i32_0 = arith.constant 0 : i32
    return %arg0, %c0_i32 : i32, i32
  }
  func.func @transform_2(%arg0: i32) -> (i32, i32) {
    %c0_i32 = arith.constant 0 : i32
    %c0_i32_0 = arith.constant 0 : i32
    %c0_i32_1 = arith.constant 0 : i32
    return %c0_i32, %c0_i32_0 : i32, i32
  }
  func.func @transform_3(%arg0: i32) -> (i32, i32) {
    %c0_i32 = arith.constant 0 : i32
    %c0_i32_0 = arith.constant 0 : i32
    %c0_i32_1 = arith.constant 0 : i32
    return %c0_i32, %c0_i32_0 : i32, i32
  }
  func.func @transform_4(%arg0: i32) -> (i32, i32) {
    %c0_i32 = arith.constant 0 : i32
    %c0_i32_0 = arith.constant 0 : i32
    %c0_i32_1 = arith.constant 0 : i32
    return %c0_i32, %c0_i32_0 : i32, i32
  }
  func.func @transform_5(%arg0: i32) -> (i32, i32) {
    %c0_i32 = arith.constant 0 : i32
    %c0_i32_0 = arith.constant 0 : i32
    %c0_i32_1 = arith.constant 0 : i32
    return %c0_i32, %c0_i32_0 : i32, i32
  }
  func.func @transform_6(%arg0: i32) -> (i32, i32) {
    %c0_i32 = arith.constant 0 : i32
    %c0_i32_0 = arith.constant 0 : i32
    %c0_i32_1 = arith.constant 0 : i32
    return %c0_i32, %c0_i32_0 : i32, i32
  }
  func.func @transform_7(%arg0: i32) -> (i32, i32) {
    %c0_i32 = arith.constant 0 : i32
    %c0_i32_0 = arith.constant 0 : i32
    %c0_i32_1 = arith.constant 0 : i32
    return %c0_i32, %c0_i32_0 : i32, i32
  }
  func.func @transform_8(%arg0: i32) -> (i32, i32) {
    %c0_i32 = arith.constant 0 : i32
    %c0_i32_0 = arith.constant 0 : i32
    %c0_i32_1 = arith.constant 0 : i32
    return %c0_i32, %c0_i32_0 : i32, i32
  }
  func.func @transform_9(%arg0: i32) -> (i32, i32) {
    %c0_i32 = arith.constant 0 : i32
    %c0_i32_0 = arith.constant 0 : i32
    %c0_i32_1 = arith.constant 0 : i32
    return %c0_i32, %c0_i32_0 : i32, i32
  }
  func.func @transform_10(%arg0: i32) -> (i32, i32) {
    %c0_i32 = arith.constant 0 : i32
    %c0_i32_0 = arith.constant 0 : i32
    %c0_i32_1 = arith.constant 0 : i32
    return %c0_i32, %c0_i32_0 : i32, i32
  }
  func.func @transform_11(%arg0: i32) -> (i32, i32) {
    %c0_i32 = arith.constant 0 : i32
    %c0_i32_0 = arith.constant 0 : i32
    %c0_i32_1 = arith.constant 0 : i32
    return %c0_i32, %c0_i32_0 : i32, i32
  }
  func.func @transform_12(%arg0: i32) -> (i32, i32) {
    %c0_i32 = arith.constant 0 : i32
    %c0_i32_0 = arith.constant 0 : i32
    %c0_i32_1 = arith.constant 0 : i32
    return %c0_i32, %c0_i32_0 : i32, i32
  }
  func.func @transform_13(%arg0: i32) -> (i32, i32) {
    %c0_i32 = arith.constant 0 : i32
    %c0_i32_0 = arith.constant 0 : i32
    %c0_i32_1 = arith.constant 0 : i32
    return %c0_i32, %c0_i32_0 : i32, i32
  }
  func.func @transform_14(%arg0: i32) -> (i32, i32) {
    %c0_i32 = arith.constant 0 : i32
    %c0_i32_0 = arith.constant 0 : i32
    return %arg0, %c0_i32 : i32, i32
  }
}

</mosaic_0001>

<llo_original>
// kernel: tpu_custom_call.1
$region0: #{tpu_custom_call.1}
  #allocation0 [shape = 'u32[]', space=smem, size = 0x4, offset = 0x4, fixed_abs, tag = 'smem constant byte address 0x4 - core index']
  #allocation1 [shape = 'u32[144,128]{1,0:T(1,128)}', space=vmem, size = 0x12000, scoped, tag = 'internal scratch']
  %s0 = inlined_call_operand.vmem [shape: f32[8,32], index: 0, kind: input, shape index: {}]
  %s1 = inlined_call_operand.vmem [shape: f32[8,16], index: 1, kind: input, shape index: {}]
  %s2 = inlined_call_operand.vmem [shape: bf16[32,128], index: 2, kind: input, shape index: {}]
  %s3 = inlined_call_operand.vmem [shape: bf16[16,128], index: 3, kind: input, shape index: {}]
  %s4 = inlined_call_operand.vmem [shape: f32[1,128], index: 4, kind: input, shape index: {}]
  %s5 = inlined_call_operand.vmem [shape: bf16[128,32], index: 5, kind: input, shape index: {}]
  %s6 = inlined_call_operand.vmem [shape: bf16[128,16], index: 6, kind: input, shape index: {}]
  %s7 = inlined_call_operand.vmem [shape: f32[1,32], index: 7, kind: input, shape index: {}]
  %s8 = inlined_call_operand.vmem [shape: f32[1,16], index: 8, kind: input, shape index: {}]
  %s9 = inlined_call_operand.vmem [shape: bf16[32,128], index: 9, kind: input, shape index: {}]
  %s10 = inlined_call_operand.vmem [shape: bf16[16,128], index: 10, kind: input, shape index: {}]
  %s11 = inlined_call_operand.vmem [shape: f32[1,128], index: 11, kind: input, shape index: {}]
  %s12 = inlined_call_operand.vmem [shape: bf16[128,128], index: 12, kind: input, shape index: {}]
  %s13 = inlined_call_operand.vmem [shape: f32[1,128], index: 13, kind: input, shape index: {}]
  %s14 = inlined_call_operand.hbm [shape: f32[8,128], index: 14, kind: output, shape index: {}]
  %s15 = sld [smem:[#allocation0]]
  $region66: #{tpu_custom_call.1} parent=0
    _
  %s17 = ssub.s32 1, %s15
  %s18 = scalar_select 0, %s17, %s15
  $region1: #{tpu_custom_call.1} parent=0
    #allocation2 [shape = 'u8[4096]{0}', space=vmem, size = 0x1000, scoped, tag = 'output window, operand 0, single buffered']
    #allocation3 [shape = 's32[1]{0}', space=sflag, size = 0x4, scoped, tag = 'scoped memory for tpu_custom_call.1']
    %19 = vsyncpa [#allocation3], 0
    // Predicated region
    $region2: #{tpu_custom_call.1} parent=1 // pred_check
      _
    $region3: #{tpu_custom_call.1} parent=1 // pred_check_branch
      %21 = sbr.rel (0) target = $region5
    $region4: #{tpu_custom_call.1} parent=1 // pred_region
      _
    $region5: #{tpu_custom_call.1} parent=1 // pred_fallthru
      _
    // Predicated region
    $region6: #{tpu_custom_call.1} parent=1 // pred_check
      _
    $region7: #{tpu_custom_call.1} parent=1 // pred_check_branch
      %23 = sbr.rel (0) target = $region9
    $region8: #{tpu_custom_call.1} parent=1 // pred_region
      _
    $region9: #{tpu_custom_call.1} parent=1 // pred_fallthru
      _
    // Predicated region
    $region10: #{tpu_custom_call.1} parent=1 // pred_check
      _
    $region11: #{tpu_custom_call.1} parent=1 // pred_check_branch
      %25 = sbr.rel (0) target = $region13
    $region12: #{tpu_custom_call.1} parent=1 // pred_region
      _
    $region13: #{tpu_custom_call.1} parent=1 // pred_fallthru
      _
    // Predicated region
    $region14: #{tpu_custom_call.1} parent=1 // pred_check
      _
    $region15: #{tpu_custom_call.1} parent=1 // pred_check_branch
      %27 = sbr.rel (0) target = $region17
    $region16: #{tpu_custom_call.1} parent=1 // pred_region
      _
    $region17: #{tpu_custom_call.1} parent=1 // pred_fallthru
      _
    // Predicated region
    $region18: #{tpu_custom_call.1} parent=1 // pred_check
      _
    $region19: #{tpu_custom_call.1} parent=1 // pred_check_branch
      %29 = sbr.rel (0) target = $region21
    $region20: #{tpu_custom_call.1} parent=1 // pred_region
      _
    $region21: #{tpu_custom_call.1} parent=1 // pred_fallthru
      _
    // Predicated region
    $region22: #{tpu_custom_call.1} parent=1 // pred_check
      _
    $region23: #{tpu_custom_call.1} parent=1 // pred_check_branch
      %31 = sbr.rel (0) target = $region25
    $region24: #{tpu_custom_call.1} parent=1 // pred_region
      _
    $region25: #{tpu_custom_call.1} parent=1 // pred_fallthru
      _
    // Predicated region
    $region26: #{tpu_custom_call.1} parent=1 // pred_check
      _
    $region27: #{tpu_custom_call.1} parent=1 // pred_check_branch
      %33 = sbr.rel (0) target = $region29
    $region28: #{tpu_custom_call.1} parent=1 // pred_region
      _
    $region29: #{tpu_custom_call.1} parent=1 // pred_fallthru
      _
    // Predicated region
    $region30: #{tpu_custom_call.1} parent=1 // pred_check
      _
    $region31: #{tpu_custom_call.1} parent=1 // pred_check_branch
      %35 = sbr.rel (0) target = $region33
    $region32: #{tpu_custom_call.1} parent=1 // pred_region
      _
    $region33: #{tpu_custom_call.1} parent=1 // pred_fallthru
      _
    // Predicated region
    $region34: #{tpu_custom_call.1} parent=1 // pred_check
      _
    $region35: #{tpu_custom_call.1} parent=1 // pred_check_branch
      %37 = sbr.rel (0) target = $region37
    $region36: #{tpu_custom_call.1} parent=1 // pred_region
      _
    $region37: #{tpu_custom_call.1} parent=1 // pred_fallthru
      _
    // Predicated region
    $region38: #{tpu_custom_call.1} parent=1 // pred_check
      _
    $region39: #{tpu_custom_call.1} parent=1 // pred_check_branch
      %39 = sbr.rel (0) target = $region41
    $region40: #{tpu_custom_call.1} parent=1 // pred_region
      _
    $region41: #{tpu_custom_call.1} parent=1 // pred_fallthru
      _
    // Predicated region
    $region42: #{tpu_custom_call.1} parent=1 // pred_check
      _
    $region43: #{tpu_custom_call.1} parent=1 // pred_check_branch
      %41 = sbr.rel (0) target = $region45
    $region44: #{tpu_custom_call.1} parent=1 // pred_region
      _
    $region45: #{tpu_custom_call.1} parent=1 // pred_fallthru
      _
    // Predicated region
    $region46: #{tpu_custom_call.1} parent=1 // pred_check
      _
    $region47: #{tpu_custom_call.1} parent=1 // pred_check_branch
      %43 = sbr.rel (0) target = $region49
    $region48: #{tpu_custom_call.1} parent=1 // pred_region
      _
    $region49: #{tpu_custom_call.1} parent=1 // pred_fallthru
      _
    // Predicated region
    $region50: #{tpu_custom_call.1} parent=1 // pred_check
      _
    $region51: #{tpu_custom_call.1} parent=1 // pred_check_branch
      %45 = sbr.rel (0) target = $region53
    $region52: #{tpu_custom_call.1} parent=1 // pred_region
      _
    $region53: #{tpu_custom_call.1} parent=1 // pred_fallthru
      _
    // Predicated region
    $region54: #{tpu_custom_call.1} parent=1 // pred_check
      _
    $region55: #{tpu_custom_call.1} parent=1 // pred_check_branch
      %47 = sbr.rel (0) target = $region57
    $region56: #{tpu_custom_call.1} parent=1 // pred_region
      _
    $region57: #{tpu_custom_call.1} parent=1 // pred_fallthru
      _
    %v49 = vld [vmem:[%s0] sm:$0xff]
    %v50 = vld [vmem:[%s1] sm:$0xff]
    %v51 = vpack.c.bf16 %v49, %v49
    %v52 = vpack.c.bf16 %v50, %v50
    %v53 = vld [vmem:[%s2] sm:$0xf]
    %v54 = vld [vmem:[%s2 + $0x4] sm:$0xf]
    %v55 = vld [vmem:[%s2 + $0x8] sm:$0xf]
    %v56 = vld [vmem:[%s2 + $0xc] sm:$0xf]
    %v57 = vld [vmem:[%s3] sm:$0xf]
    %v58 = vld [vmem:[%s3 + $0x4] sm:$0xf]
    %v61 = vunpack.c.l.b16 %v57
    %v62 = vunpack.c.l.b16 %v58
    %v63 = vpack.c.b16 %v62, %v61
    %vm65 = vcmask 130048
    %v67 = vsel %vm65, %v52, 0
    %69 = vmatprep.subr.bf16.mxu0 0
    %70 = vmatpush1.bf16.msra.mxu0 %v63
    %71 = vmatprep.subr.bf16.mxu0 0
    %72 = vmatpush1.bf16.msra.mxu0 0
    %73 = vmatprep.subr.bf16.mxu0 0
    %74 = vmatpush1.bf16.msra.mxu0 0
    %75 = vmatprep.subr.bf16.mxu0 0
    %76 = vmatpush1.bf16.msra.mxu0 0
    %77 = vmatprep.subr.bf16.mxu0 0
    %78 = vmatpush1.bf16.msra.mxu0 0
    %79 = vmatprep.subr.bf16.mxu0 0
    %80 = vmatpush1.bf16.msra.mxu0 0
    %81 = vmatprep.subr.bf16.mxu0 0
    %82 = vmatpush1.bf16.msra.mxu0 0
    %83 = vmatprep.subr.bf16.mxu0 0
    %84 = vmatpush1.bf16.msra.mxu0 0
    %85 = vmatprep.subr.bf16.mxu0 0
    %86 = vmatpush1.bf16.msra.mxu0 0
    %87 = vmatprep.subr.bf16.mxu0 0
    %88 = vmatpush1.bf16.msra.mxu0 0
    %89 = vmatprep.subr.bf16.mxu0 0
    %90 = vmatpush1.bf16.msra.mxu0 0
    %91 = vmatprep.subr.bf16.mxu0 0
    %92 = vmatpush1.bf16.msra.mxu0 0
    %93 = vmatprep.subr.bf16.mxu0 0
    %94 = vmatpush1.bf16.msra.mxu0 0
    %95 = vmatprep.subr.bf16.mxu0 0
    %96 = vmatpush1.bf16.msra.mxu0 0
    %97 = vmatprep.subr.bf16.mxu0 0
    %98 = vmatpush1.bf16.msra.mxu0 0
    %99 = vmatprep.subr.bf16.mxu0 0
    %100 = vmatpush1.bf16.msra.mxu0 0
    %101 = vmatprep.mubr.bf16.mxu0 0
    %102 = vmatmul.mubr.bf16.gmra.mrb[0].mxu0 %v67
    %v103 = vpop.f32.mrb[0].mxu0
    %v104 = vadd.f32 0.0, %v103
    %v105 = vpop.f32.mrb[0].mxu0
    %v106 = vpop.f32.mrb[0].mxu0
    %v107 = vpop.f32.mrb[0].mxu0
    %108 = vdwg.mxu0
    %v113 = vunpack.c.l.b16 %v53
    %v114 = vunpack.c.l.b16 %v54
    %v115 = vunpack.c.l.b16 %v55
    %v116 = vunpack.c.l.b16 %v56
    %v117 = vpack.c.b16 %v114, %v113
    %v118 = vpack.c.b16 %v116, %v115
    %vm121 = vcmask 261120
    %v123 = vsel %vm121, %v51, 0
    %125 = vmatprep.subr.bf16.mxu0 0
    %126 = vmatpush1.bf16.msra.mxu0 %v117
    %127 = vmatprep.subr.bf16.mxu0 0
    %128 = vmatpush1.bf16.msra.mxu0 %v118
    %129 = vmatprep.subr.bf16.mxu0 0
    %130 = vmatpush1.bf16.msra.mxu0 0
    %131 = vmatprep.subr.bf16.mxu0 0
    %132 = vmatpush1.bf16.msra.mxu0 0
    %133 = vmatprep.subr.bf16.mxu0 0
    %134 = vmatpush1.bf16.msra.mxu0 0
    %135 = vmatprep.subr.bf16.mxu0 0
    %136 = vmatpush1.bf16.msra.mxu0 0
    %137 = vmatprep.subr.bf16.mxu0 0
    %138 = vmatpush1.bf16.msra.mxu0 0
    %139 = vmatprep.subr.bf16.mxu0 0
    %140 = vmatpush1.bf16.msra.mxu0 0
    %141 = vmatprep.subr.bf16.mxu0 0
    %142 = vmatpush1.bf16.msra.mxu0 0
    %143 = vmatprep.subr.bf16.mxu0 0
    %144 = vmatpush1.bf16.msra.mxu0 0
    %145 = vmatprep.subr.bf16.mxu0 0
    %146 = vmatpush1.bf16.msra.mxu0 0
    %147 = vmatprep.subr.bf16.mxu0 0
    %148 = vmatpush1.bf16.msra.mxu0 0
    %149 = vmatprep.subr.bf16.mxu0 0
    %150 = vmatpush1.bf16.msra.mxu0 0
    %151 = vmatprep.subr.bf16.mxu0 0
    %152 = vmatpush1.bf16.msra.mxu0 0
    %153 = vmatprep.subr.bf16.mxu0 0
    %154 = vmatpush1.bf16.msra.mxu0 0
    %155 = vmatprep.subr.bf16.mxu0 0
    %156 = vmatpush1.bf16.msra.mxu0 0
    %157 = vmatprep.mubr.bf16.mxu0 0
    %158 = vmatmul.mubr.bf16.gmra.mrb[0].mxu0 %v123
    %v159 = vpop.f32.mrb[0].mxu0
    %v160 = vadd.f32 %v104, %v159
    %v161 = vpop.f32.mrb[0].mxu0
    %v162 = vpop.f32.mrb[0].mxu0
    %v163 = vpop.f32.mrb[0].mxu0
    %164 = vdwg.mxu0
    %v165 = vld [vmem:[%s4] sm:$0x1]
    %v167 = vlaneseq
    %v168 = vshrl.u32 %v167, 7
    %v169 = vsub.s32 0, %v168
    %v170 = vrot.slane %v165, %v169
    %v172 = vadd.f32 %v160, %v170
    %v173 = vmax.f32 %v172, 0.0
    %v174 = vpack.c.bf16 %v173, %v173
    %v175 = vld [vmem:[%s5] sm:$0xf]
    %v176 = vld [vmem:[%s5 + $0x4] sm:$0xf]
    %v177 = vld [vmem:[%s5 + $0x8] sm:$0xf]
    %v178 = vld [vmem:[%s5 + $0xc] sm:$0xf]
    %v179 = vld [vmem:[%s5 + $0x10] sm:$0xf]
    %v180 = vld [vmem:[%s5 + $0x14] sm:$0xf]
    %v181 = vld [vmem:[%s5 + $0x18] sm:$0xf]
    %v182 = vld [vmem:[%s5 + $0x1c] sm:$0xf]
    %v183 = vld [vmem:[%s5 + $0x20] sm:$0xf]
    %v184 = vld [vmem:[%s5 + $0x24] sm:$0xf]
    %v185 = vld [vmem:[%s5 + $0x28] sm:$0xf]
    %v186 = vld [vmem:[%s5 + $0x2c] sm:$0xf]
    %v187 = vld [vmem:[%s5 + $0x30] sm:$0xf]
    %v188 = vld [vmem:[%s5 + $0x34] sm:$0xf]
    %v189 = vld [vmem:[%s5 + $0x38] sm:$0xf]
    %v190 = vld [vmem:[%s5 + $0x3c] sm:$0xf]
    %v191 = vld [vmem:[%s7] sm:$0x1]
    %v193 = vlaneseq
    %v194 = vshrl.u32 %v193, 7
    %v195 = vsub.s32 0, %v194
    %v196 = vrot.slane %v191, %v195
    %v214 = vunpack.c.l.b16 %v175
    %v215 = vunpack.c.l.b16 %v176
    %v216 = vunpack.c.l.b16 %v177
    %v217 = vunpack.c.l.b16 %v178
    %v218 = vunpack.c.l.b16 %v179
    %v219 = vunpack.c.l.b16 %v180
    %v220 = vunpack.c.l.b16 %v181
    %v221 = vunpack.c.l.b16 %v182
    %v222 = vunpack.c.l.b16 %v183
    %v223 = vunpack.c.l.b16 %v184
    %v224 = vunpack.c.l.b16 %v185
    %v225 = vunpack.c.l.b16 %v186
    %v226 = vunpack.c.l.b16 %v187
    %v227 = vunpack.c.l.b16 %v188
    %v228 = vunpack.c.l.b16 %v189
    %v229 = vunpack.c.l.b16 %v190
    %v230 = vpack.c.b16 %v215, %v214
    %v231 = vpack.c.b16 %v217, %v216
    %v232 = vpack.c.b16 %v219, %v218
    %v233 = vpack.c.b16 %v221, %v220
    %v234 = vpack.c.b16 %v223, %v222
    %v235 = vpack.c.b16 %v225, %v224
    %v236 = vpack.c.b16 %v227, %v226
    %v237 = vpack.c.b16 %v229, %v228
    %246 = vmatprep.subr.bf16.mxu0 0
    %247 = vmatpush1.bf16.msra.mxu0 %v230
    %248 = vmatprep.subr.bf16.mxu0 0
    %249 = vmatpush1.bf16.msra.mxu0 %v231
    %250 = vmatprep.subr.bf16.mxu0 0
    %251 = vmatpush1.bf16.msra.mxu0 %v232
    %252 = vmatprep.subr.bf16.mxu0 0
    %253 = vmatpush1.bf16.msra.mxu0 %v233
    %254 = vmatprep.subr.bf16.mxu0 0
    %255 = vmatpush1.bf16.msra.mxu0 %v234
    %256 = vmatprep.subr.bf16.mxu0 0
    %257 = vmatpush1.bf16.msra.mxu0 %v235
    %258 = vmatprep.subr.bf16.mxu0 0
    %259 = vmatpush1.bf16.msra.mxu0 %v236
    %260 = vmatprep.subr.bf16.mxu0 0
    %261 = vmatpush1.bf16.msra.mxu0 %v237
    %262 = vmatprep.subr.bf16.mxu0 0
    %263 = vmatpush1.bf16.msra.mxu0 0
    %264 = vmatprep.subr.bf16.mxu0 0
    %265 = vmatpush1.bf16.msra.mxu0 0
    %266 = vmatprep.subr.bf16.mxu0 0
    %267 = vmatpush1.bf16.msra.mxu0 0
    %268 = vmatprep.subr.bf16.mxu0 0
    %269 = vmatpush1.bf16.msra.mxu0 0
    %270 = vmatprep.subr.bf16.mxu0 0
    %271 = vmatpush1.bf16.msra.mxu0 0
    %272 = vmatprep.subr.bf16.mxu0 0
    %273 = vmatpush1.bf16.msra.mxu0 0
    %274 = vmatprep.subr.bf16.mxu0 0
    %275 = vmatpush1.bf16.msra.mxu0 0
    %276 = vmatprep.subr.bf16.mxu0 0
    %277 = vmatpush1.bf16.msra.mxu0 0
    %278 = vmatprep.mubr.bf16.mxu0 0
    %279 = vmatmul.mubr.bf16.gmra.mrb[0].mxu0 %v174
    %v280 = vpop.f32.mrb[0].mxu0
    %v281 = vadd.f32 %v196, %v280
    %v282 = vpop.f32.mrb[0].mxu0
    %v283 = vpop.f32.mrb[0].mxu0
    %v284 = vpop.f32.mrb[0].mxu0
    %285 = vdwg.mxu0
    %v286 = vld [vmem:[%s6] sm:$0xf]
    %v287 = vld [vmem:[%s6 + $0x4] sm:$0xf]
    %v288 = vld [vmem:[%s6 + $0x8] sm:$0xf]
    %v289 = vld [vmem:[%s6 + $0xc] sm:$0xf]
    %v290 = vld [vmem:[%s6 + $0x10] sm:$0xf]
    %v291 = vld [vmem:[%s6 + $0x14] sm:$0xf]
    %v292 = vld [vmem:[%s6 + $0x18] sm:$0xf]
    %v293 = vld [vmem:[%s6 + $0x1c] sm:$0xf]
    %v294 = vld [vmem:[%s6 + $0x20] sm:$0xf]
    %v295 = vld [vmem:[%s6 + $0x24] sm:$0xf]
    %v296 = vld [vmem:[%s6 + $0x28] sm:$0xf]
    %v297 = vld [vmem:[%s6 + $0x2c] sm:$0xf]
    %v298 = vld [vmem:[%s6 + $0x30] sm:$0xf]
    %v299 = vld [vmem:[%s6 + $0x34] sm:$0xf]
    %v300 = vld [vmem:[%s6 + $0x38] sm:$0xf]
    %v301 = vld [vmem:[%s6 + $0x3c] sm:$0xf]
    %v302 = vld [vmem:[%s8] sm:$0x1]
    %v304 = vlaneseq
    %v305 = vshrl.u32 %v304, 7
    %v306 = vsub.s32 0, %v305
    %v307 = vrot.slane %v302, %v306
    %v325 = vunpack.c.l.b16 %v286
    %v326 = vunpack.c.l.b16 %v287
    %v327 = vunpack.c.l.b16 %v288
    %v328 = vunpack.c.l.b16 %v289
    %v329 = vunpack.c.l.b16 %v290
    %v330 = vunpack.c.l.b16 %v291
    %v331 = vunpack.c.l.b16 %v292
    %v332 = vunpack.c.l.b16 %v293
    %v333 = vunpack.c.l.b16 %v294
    %v334 = vunpack.c.l.b16 %v295
    %v335 = vunpack.c.l.b16 %v296
    %v336 = vunpack.c.l.b16 %v297
    %v337 = vunpack.c.l.b16 %v298
    %v338 = vunpack.c.l.b16 %v299
    %v339 = vunpack.c.l.b16 %v300
    %v340 = vunpack.c.l.b16 %v301
    %v341 = vpack.c.b16 %v326, %v325
    %v342 = vpack.c.b16 %v328, %v327
    %v343 = vpack.c.b16 %v330, %v329
    %v344 = vpack.c.b16 %v332, %v331
    %v345 = vpack.c.b16 %v334, %v333
    %v346 = vpack.c.b16 %v336, %v335
    %v347 = vpack.c.b16 %v338, %v337
    %v348 = vpack.c.b16 %v340, %v339
    %357 = vmatprep.subr.bf16.mxu0 0
    %358 = vmatpush1.bf16.msra.mxu0 %v341
    %359 = vmatprep.subr.bf16.mxu0 0
    %360 = vmatpush1.bf16.msra.mxu0 %v342
    %361 = vmatprep.subr.bf16.mxu0 0
    %362 = vmatpush1.bf16.msra.mxu0 %v343
    %363 = vmatprep.subr.bf16.mxu0 0
    %364 = vmatpush1.bf16.msra.mxu0 %v344
    %365 = vmatprep.subr.bf16.mxu0 0
    %366 = vmatpush1.bf16.msra.mxu0 %v345
    %367 = vmatprep.subr.bf16.mxu0 0
    %368 = vmatpush1.bf16.msra.mxu0 %v346
    %369 = vmatprep.subr.bf16.mxu0 0
    %370 = vmatpush1.bf16.msra.mxu0 %v347
    %371 = vmatprep.subr.bf16.mxu0 0
    %372 = vmatpush1.bf16.msra.mxu0 %v348
    %373 = vmatprep.subr.bf16.mxu0 0
    %374 = vmatpush1.bf16.msra.mxu0 0
    %375 = vmatprep.subr.bf16.mxu0 0
    %376 = vmatpush1.bf16.msra.mxu0 0
    %377 = vmatprep.subr.bf16.mxu0 0
    %378 = vmatpush1.bf16.msra.mxu0 0
    %379 = vmatprep.subr.bf16.mxu0 0
    %380 = vmatpush1.bf16.msra.mxu0 0
    %381 = vmatprep.subr.bf16.mxu0 0
    %382 = vmatpush1.bf16.msra.mxu0 0
    %383 = vmatprep.subr.bf16.mxu0 0
    %384 = vmatpush1.bf16.msra.mxu0 0
    %385 = vmatprep.subr.bf16.mxu0 0
    %386 = vmatpush1.bf16.msra.mxu0 0
    %387 = vmatprep.subr.bf16.mxu0 0
    %388 = vmatpush1.bf16.msra.mxu0 0
    %389 = vmatprep.mubr.bf16.mxu0 0
    %390 = vmatmul.mubr.bf16.gmra.mrb[0].mxu0 %v174
    %v391 = vpop.f32.mrb[0].mxu0
    %v392 = vadd.f32 %v307, %v391
    %v393 = vpop.f32.mrb[0].mxu0
    %v394 = vpop.f32.mrb[0].mxu0
    %v395 = vpop.f32.mrb[0].mxu0
    %396 = vdwg.mxu0
    %v397 = vsel %vm121, %v281, -inf
    %398 = vmax.xlane.f32.xlu0 %v397
    %v399 = vpop.xlane.xlu0 %398
    %v400 = vsel %vm65, %v392, -inf
    %401 = vmax.xlane.f32.xlu0 %v400
    %v402 = vpop.xlane.xlu0 %401
    %v403 = vmax.f32 %v399, %v402
    %v404 = vsub.f32 %v281, %v403
    %v405 = vmul.f32 %v404, 1.442695
    %v406 = vpow.pop %v405
    %v407 = vsub.f32 %v392, %v403
    %v408 = vmul.f32 %v407, 1.442695
    %v409 = vpow.pop %v408
    %v410 = vsel %vm121, %v406, 0.0
    %411 = vadd.xlane.f32.xlu0 %v410
    %v412 = vpop.xlane.xlu0 %411
    %v413 = vsel %vm65, %v409, 0.0
    %414 = vadd.xlane.f32.xlu0 %v413
    %v415 = vpop.xlane.xlu0 %414
    %v416 = vadd.f32 %v412, %v415
    %v417 = vrcp.pop %v416
    %v418 = vmul.f32 %v406, %v417
    %v419 = vmul.f32 %v418, %v49
    %v420 = vpack.c.bf16 %v419, %v419
    %v421 = vmul.f32 %v409, %v417
    %v422 = vmul.f32 %v421, %v50
    %v423 = vpack.c.bf16 %v422, %v422
    %v424 = vld [vmem:[%s9] sm:$0xf]
    %v425 = vld [vmem:[%s9 + $0x4] sm:$0xf]
    %v426 = vld [vmem:[%s9 + $0x8] sm:$0xf]
    %v427 = vld [vmem:[%s9 + $0xc] sm:$0xf]
    %v428 = vld [vmem:[%s10] sm:$0xf]
    %v429 = vld [vmem:[%s10 + $0x4] sm:$0xf]
    %v432 = vunpack.c.l.b16 %v428
    %v433 = vunpack.c.l.b16 %v429
    %v434 = vpack.c.b16 %v433, %v432
    %v437 = vsel %vm65, %v423, 0
    %439 = vmatprep.subr.bf16.mxu0 0
    %440 = vmatpush1.bf16.msra.mxu0 %v434
    %441 = vmatprep.subr.bf16.mxu0 0
    %442 = vmatpush1.bf16.msra.mxu0 0
    %443 = vmatprep.subr.bf16.mxu0 0
    %444 = vmatpush1.bf16.msra.mxu0 0
    %445 = vmatprep.subr.bf16.mxu0 0
    %446 = vmatpush1.bf16.msra.mxu0 0
    %447 = vmatprep.subr.bf16.mxu0 0
    %448 = vmatpush1.bf16.msra.mxu0 0
    %449 = vmatprep.subr.bf16.mxu0 0
    %450 = vmatpush1.bf16.msra.mxu0 0
    %451 = vmatprep.subr.bf16.mxu0 0
    %452 = vmatpush1.bf16.msra.mxu0 0
    %453 = vmatprep.subr.bf16.mxu0 0
    %454 = vmatpush1.bf16.msra.mxu0 0
    %455 = vmatprep.subr.bf16.mxu0 0
    %456 = vmatpush1.bf16.msra.mxu0 0
    %457 = vmatprep.subr.bf16.mxu0 0
    %458 = vmatpush1.bf16.msra.mxu0 0
    %459 = vmatprep.subr.bf16.mxu0 0
    %460 = vmatpush1.bf16.msra.mxu0 0
    %461 = vmatprep.subr.bf16.mxu0 0
    %462 = vmatpush1.bf16.msra.mxu0 0
    %463 = vmatprep.subr.bf16.mxu0 0
    %464 = vmatpush1.bf16.msra.mxu0 0
    %465 = vmatprep.subr.bf16.mxu0 0
    %466 = vmatpush1.bf16.msra.mxu0 0
    %467 = vmatprep.subr.bf16.mxu0 0
    %468 = vmatpush1.bf16.msra.mxu0 0
    %469 = vmatprep.subr.bf16.mxu0 0
    %470 = vmatpush1.bf16.msra.mxu0 0
    %471 = vmatprep.mubr.bf16.mxu0 0
    %472 = vmatmul.mubr.bf16.gmra.mrb[0].mxu0 %v437
    %v473 = vpop.f32.mrb[0].mxu0
    %v474 = vadd.f32 0.0, %v473
    %v475 = vpop.f32.mrb[0].mxu0
    %v476 = vpop.f32.mrb[0].mxu0
    %v477 = vpop.f32.mrb[0].mxu0
    %478 = vdwg.mxu0
    %v483 = vunpack.c.l.b16 %v424
    %v484 = vunpack.c.l.b16 %v425
    %v485 = vunpack.c.l.b16 %v426
    %v486 = vunpack.c.l.b16 %v427
    %v487 = vpack.c.b16 %v484, %v483
    %v488 = vpack.c.b16 %v486, %v485
    %v492 = vsel %vm121, %v420, 0
    %494 = vmatprep.subr.bf16.mxu0 0
    %495 = vmatpush1.bf16.msra.mxu0 %v487
    %496 = vmatprep.subr.bf16.mxu0 0
    %497 = vmatpush1.bf16.msra.mxu0 %v488
    %498 = vmatprep.subr.bf16.mxu0 0
    %499 = vmatpush1.bf16.msra.mxu0 0
    %500 = vmatprep.subr.bf16.mxu0 0
    %501 = vmatpush1.bf16.msra.mxu0 0
    %502 = vmatprep.subr.bf16.mxu0 0
    %503 = vmatpush1.bf16.msra.mxu0 0
    %504 = vmatprep.subr.bf16.mxu0 0
    %505 = vmatpush1.bf16.msra.mxu0 0
    %506 = vmatprep.subr.bf16.mxu0 0
    %507 = vmatpush1.bf16.msra.mxu0 0
    %508 = vmatprep.subr.bf16.mxu0 0
    %509 = vmatpush1.bf16.msra.mxu0 0
    %510 = vmatprep.subr.bf16.mxu0 0
    %511 = vmatpush1.bf16.msra.mxu0 0
    %512 = vmatprep.subr.bf16.mxu0 0
    %513 = vmatpush1.bf16.msra.mxu0 0
    %514 = vmatprep.subr.bf16.mxu0 0
    %515 = vmatpush1.bf16.msra.mxu0 0
    %516 = vmatprep.subr.bf16.mxu0 0
    %517 = vmatpush1.bf16.msra.mxu0 0
    %518 = vmatprep.subr.bf16.mxu0 0
    %519 = vmatpush1.bf16.msra.mxu0 0
    %520 = vmatprep.subr.bf16.mxu0 0
    %521 = vmatpush1.bf16.msra.mxu0 0
    %522 = vmatprep.subr.bf16.mxu0 0
    %523 = vmatpush1.bf16.msra.mxu0 0
    %524 = vmatprep.subr.bf16.mxu0 0
    %525 = vmatpush1.bf16.msra.mxu0 0
    %526 = vmatprep.mubr.bf16.mxu0 0
    %527 = vmatmul.mubr.bf16.gmra.mrb[0].mxu0 %v492
    %v528 = vpop.f32.mrb[0].mxu0
    %v529 = vadd.f32 %v474, %v528
    %v530 = vpop.f32.mrb[0].mxu0
    %v531 = vpop.f32.mrb[0].mxu0
    %v532 = vpop.f32.mrb[0].mxu0
    %533 = vdwg.mxu0
    %v534 = vld [vmem:[%s11] sm:$0x1]
    %v536 = vlaneseq
    %v537 = vshrl.u32 %v536, 7
    %v538 = vsub.s32 0, %v537
    %v539 = vrot.slane %v534, %v538
    %v541 = vadd.f32 %v529, %v539
    %v542 = vmax.f32 %v541, 0.0
    %v543 = vpack.c.bf16 %v542, %v542
    %v544 = vld [vmem:[%s12] sm:$0xf]
    %v545 = vld [vmem:[%s12 + $0x4] sm:$0xf]
    %v546 = vld [vmem:[%s12 + $0x8] sm:$0xf]
    %v547 = vld [vmem:[%s12 + $0xc] sm:$0xf]
    %v548 = vld [vmem:[%s12 + $0x10] sm:$0xf]
    %v549 = vld [vmem:[%s12 + $0x14] sm:$0xf]
    %v550 = vld [vmem:[%s12 + $0x18] sm:$0xf]
    %v551 = vld [vmem:[%s12 + $0x1c] sm:$0xf]
    %v552 = vld [vmem:[%s12 + $0x20] sm:$0xf]
    %v553 = vld [vmem:[%s12 + $0x24] sm:$0xf]
    %v554 = vld [vmem:[%s12 + $0x28] sm:$0xf]
    %v555 = vld [vmem:[%s12 + $0x2c] sm:$0xf]
    %v556 = vld [vmem:[%s12 + $0x30] sm:$0xf]
    %v557 = vld [vmem:[%s12 + $0x34] sm:$0xf]
    %v558 = vld [vmem:[%s12 + $0x38] sm:$0xf]
    %v559 = vld [vmem:[%s12 + $0x3c] sm:$0xf]
    %v560 = vld [vmem:[%s13] sm:$0x1]
    %v562 = vlaneseq
    %v563 = vshrl.u32 %v562, 7
    %v564 = vsub.s32 0, %v563
    %v565 = vrot.slane %v560, %v564
    %v583 = vunpack.c.l.b16 %v544
    %v584 = vunpack.c.l.b16 %v545
    %v585 = vunpack.c.l.b16 %v546
    %v586 = vunpack.c.l.b16 %v547
    %v587 = vunpack.c.l.b16 %v548
    %v588 = vunpack.c.l.b16 %v549
    %v589 = vunpack.c.l.b16 %v550
    %v590 = vunpack.c.l.b16 %v551
    %v591 = vunpack.c.l.b16 %v552
    %v592 = vunpack.c.l.b16 %v553
    %v593 = vunpack.c.l.b16 %v554
    %v594 = vunpack.c.l.b16 %v555
    %v595 = vunpack.c.l.b16 %v556
    %v596 = vunpack.c.l.b16 %v557
    %v597 = vunpack.c.l.b16 %v558
    %v598 = vunpack.c.l.b16 %v559
    %v599 = vpack.c.b16 %v584, %v583
    %v600 = vpack.c.b16 %v586, %v585
    %v601 = vpack.c.b16 %v588, %v587
    %v602 = vpack.c.b16 %v590, %v589
    %v603 = vpack.c.b16 %v592, %v591
    %v604 = vpack.c.b16 %v594, %v593
    %v605 = vpack.c.b16 %v596, %v595
    %v606 = vpack.c.b16 %v598, %v597
    %615 = vmatprep.subr.bf16.mxu0 0
    %616 = vmatpush1.bf16.msra.mxu0 %v599
    %617 = vmatprep.subr.bf16.mxu0 0
    %618 = vmatpush1.bf16.msra.mxu0 %v600
    %619 = vmatprep.subr.bf16.mxu0 0
    %620 = vmatpush1.bf16.msra.mxu0 %v601
    %621 = vmatprep.subr.bf16.mxu0 0
    %622 = vmatpush1.bf16.msra.mxu0 %v602
    %623 = vmatprep.subr.bf16.mxu0 0
    %624 = vmatpush1.bf16.msra.mxu0 %v603
    %625 = vmatprep.subr.bf16.mxu0 0
    %626 = vmatpush1.bf16.msra.mxu0 %v604
    %627 = vmatprep.subr.bf16.mxu0 0
    %628 = vmatpush1.bf16.msra.mxu0 %v605
    %629 = vmatprep.subr.bf16.mxu0 0
    %630 = vmatpush1.bf16.msra.mxu0 %v606
    %631 = vmatprep.subr.bf16.mxu0 0
    %632 = vmatpush1.bf16.msra.mxu0 0
    %633 = vmatprep.subr.bf16.mxu0 0
    %634 = vmatpush1.bf16.msra.mxu0 0
    %635 = vmatprep.subr.bf16.mxu0 0
    %636 = vmatpush1.bf16.msra.mxu0 0
    %637 = vmatprep.subr.bf16.mxu0 0
    %638 = vmatpush1.bf16.msra.mxu0 0
    %639 = vmatprep.subr.bf16.mxu0 0
    %640 = vmatpush1.bf16.msra.mxu0 0
    %641 = vmatprep.subr.bf16.mxu0 0
    %642 = vmatpush1.bf16.msra.mxu0 0
    %643 = vmatprep.subr.bf16.mxu0 0
    %644 = vmatpush1.bf16.msra.mxu0 0
    %645 = vmatprep.subr.bf16.mxu0 0
    %646 = vmatpush1.bf16.msra.mxu0 0
    %647 = vmatprep.mubr.bf16.mxu0 0
    %648 = vmatmul.mubr.bf16.gmra.mrb[0].mxu0 %v543
    %v649 = vpop.f32.mrb[0].mxu0
    %v650 = vadd.f32 %v565, %v649
    %v651 = vpop.f32.mrb[0].mxu0
    %v652 = vpop.f32.mrb[0].mxu0
    %v653 = vpop.f32.mrb[0].mxu0
    %654 = vdwg.mxu0
    %655 = vst [vmem:[#allocation2] sm:$0xff] %v650
    // Predicated region
    $region58: #{tpu_custom_call.1} parent=1 // pred_check
      _
    $region59: #{tpu_custom_call.1} parent=1 // pred_check_branch
      %657 = sbr.rel (0) target = $region61
    $region60: #{tpu_custom_call.1} parent=1 // pred_region
      %s659 = ssub.s32 128, 128
      %660 = vsyncadd [#allocation3], %s659
      %s662 = sshll.u32 [#allocation2], 4
      %s663 = int_to_ptr.vmem [resolvable:$true] %s662
      %665 = dma.vmem_to_hbm [thread:$0]  %s663, 128, %s14, [#allocation3]
    $region61: #{tpu_custom_call.1} parent=1 // pred_fallthru
      _
    // Predicated region
    $region62: #{tpu_custom_call.1} parent=1 // pred_check
      _
    $region63: #{tpu_custom_call.1} parent=1 // pred_check_branch
      %667 = sbr.rel (0) target = $region65
    $region64: #{tpu_custom_call.1} parent=1 // pred_region
      %668 = dma.done [#allocation3], 128
    $region65: #{tpu_custom_call.1} parent=1 // pred_fallthru
      _
    %669 = vsyncpa [#allocation3], 1

</llo_original>
